<compile_context>
chip_gen: v7x
topology: tpu7x:2x2x1
jax: 0.10.0
libtpu: 0.0.40
codegen_flags: <defaults>
</compile_context>

<pallas_src>
import jax
import jax.numpy as jnp
from jax.experimental import pallas as pl
from jax.experimental.pallas import tpu as pltpu

INPUT_DIM = 6   # len(features) in the reference module
H1 = 64
H2 = 32
H3 = 16
OUT = 1
LANE = 128      # TPU lane width


def tada_kernel(x_ref,
                w1_ref, b1_ref,
                w2_ref, b2_ref,
                wt_ref, bt_ref,
                wp1_ref, bp1_ref,
                wp2_ref, bp2_ref,
                pred_ref):
    # x is (features, batch_tile): batch on lanes -> lane-dense compute/stores.
    x = x_ref[...]                                                   # (6,  TB)

    # feature_extractor: Linear(6,64)+ReLU, Linear(64,32)+ReLU  (Dropout = id)
    h1 = jnp.dot(w1_ref[...], x, preferred_element_type=jnp.float32) + b1_ref[...]
    h1 = jnp.maximum(h1, 0.0)                                        # (64, TB)
    h2 = jnp.dot(w2_ref[...], h1, preferred_element_type=jnp.float32) + b2_ref[...]
    h2 = jnp.maximum(h2, 0.0)                                        # (32, TB)

    # temporal_adapter: Linear(32,32) + Tanh
    t = jnp.tanh(jnp.dot(wt_ref[...], h2,
                         preferred_element_type=jnp.float32) + bt_ref[...])  # (32, TB)

    # predictor: Linear(32,16)+ReLU, Linear(16,1)
    p1 = jnp.dot(wp1_ref[...], t, preferred_element_type=jnp.float32) + bp1_ref[...]
    p1 = jnp.maximum(p1, 0.0)                                        # (16, TB)
    pred = jnp.dot(wp2_ref[...], p1, preferred_element_type=jnp.float32) + bp2_ref[...]

    pred_ref[...] = pred.astype(pred_ref.dtype)                      # (1,  TB)


def _resident_spec(shape):
    # Weights / biases: constant block index -> fetched once, stay VMEM-resident
    # across all batch tiles.
    return pl.BlockSpec(shape, lambda b: (0,) * len(shape))


def _pick_tile(batch):
    # Lane tile must be a multiple of 128.  Cap at 512 columns: per-tile
    # activation footprint is tiny (< 32 KiB) and 512 lanes amortizes the
    # ~0.35 us per-grid-step overhead while fitting every generation's VMEM.
    padded = pl.cdiv(batch, LANE) * LANE
    return min(512, padded)


@jax.jit
def tada_forward(x, params):
    """Returns (prediction, domain_output) with domain_output=None (eval mode)."""
    B = x.shape[0]
    TB = _pick_tile(B)
    B_pad = pl.cdiv(B, TB) * TB

    # Transpose so batch lives on the lane axis; pad batch to a full tile.
    xt = jnp.pad(x.T.astype(jnp.float32), ((0, 0), (0, B_pad - B)))

    weights = (
        params["w1"], params["b1"],
        params["w2"], params["b2"],
        params["wt"], params["bt"],
        params["wp1"], params["bp1"],
        params["wp2"], params["bp2"],
    )

    pred_t = pl.pallas_call(
        tada_kernel,
        out_shape=jax.ShapeDtypeStruct((OUT, B_pad), jnp.float32),
        grid_spec=pltpu.PrefetchScalarGridSpec(
            num_scalar_prefetch=0,
            grid=(B_pad // TB,),
            in_specs=[pl.BlockSpec((INPUT_DIM, TB), lambda b: (0, b))]
                     + [_resident_spec(w.shape) for w in weights],
            out_specs=pl.BlockSpec((OUT, TB), lambda b: (0, b)),
        ),
        compiler_params=pltpu.CompilerParams(
            # Batch tiles are independent -> shard across both TCs on v7x.
            dimension_semantics=("parallel",),
            # Explicit budget: safe on v7x (64 MiB physical) and v5e/v6e.
            vmem_limit_bytes=32 * 1024 * 1024,
        ),
    )(xt, *weights)

    # Drop padded columns, return (B, 1) like the PyTorch module.
    return pred_t[:, :B].T, None


def init_params(key):
    """Deterministic synthetic parameters (PyTorch-Linear-style uniform init).

    Weights are stored in PyTorch (out, in) layout; biases as (out, 1) columns.
    """
    def linear(key, fan_in, fan_out):
        kw, kb = jax.random.split(key)
        bound = 1.0 / (fan_in ** 0.5)
        w = jax.random.uniform(kw, (fan_out, fan_in), jnp.float32, -bound, bound)
        b = jax.random.uniform(kb, (fan_out, 1), jnp.float32, -bound, bound)
        return w, b

    keys = jax.random.split(key, 5)
    w1, b1 = linear(keys[0], INPUT_DIM, H1)
    w2, b2 = linear(keys[1], H1, H2)
    wt, bt = linear(keys[2], H2, H2)
    wp1, bp1 = linear(keys[3], H2, H3)
    wp2, bp2 = linear(keys[4], H3, OUT)
    return {
        "w1": w1, "b1": b1,
        "w2": w2, "b2": b2,
        "wt": wt, "bt": bt,
        "wp1": wp1, "bp1": bp1,
        "wp2": wp2, "bp2": bp2,
    }


def reference_forward(x, p):
    """Pure-JAX reference (standard (B, F) layout) for correctness checking."""
    h1 = jnp.maximum(x @ p["w1"].T + p["b1"].T, 0.0)
    h2 = jnp.maximum(h1 @ p["w2"].T + p["b2"].T, 0.0)
    t = jnp.tanh(h2 @ p["wt"].T + p["bt"].T)
    p1 = jnp.maximum(t @ p["wp1"].T + p["bp1"].T, 0.0)
    return p1 @ p["wp2"].T + p["bp2"].T


if __name__ == "__main__":
    key = jax.random.PRNGKey(0)
    k_x_small, k_x_big, k_p = jax.random.split(key, 3)
    params = init_params(k_p)

    # Small batch (single padded tile) and a larger batch that exercises
    # multi-tile grid + partial-tile padding (B=640 -> TB=512, 2 tiles).
    for k_batch, B in ((k_x_small, 8), (k_x_big, 640)):
        x = jax.random.normal(k_batch, (B, INPUT_DIM), dtype=jnp.float32)
        pred, domain_out = tada_forward(x, params)
        pred = jax.block_until_ready(pred)

        ref = reference_forward(x, params)
        assert pred.shape == (B, OUT)
        assert domain_out is None
        assert jnp.allclose(pred, ref, atol=1e-4, rtol=1e-4), \
            f"mismatch vs reference at B={B}"

    print("KERNEL_OK")
</pallas_src>

<mosaic_0001>
module attributes {stable_mosaic.version = 11 : i64} {
  func.func @tada_kernel(%arg0: i32, %arg1: memref<6x128xf32, #tpu.memory_space<vmem>>, %arg2: memref<64x6xf32, #tpu.memory_space<vmem>>, %arg3: memref<64x1xf32, #tpu.memory_space<vmem>>, %arg4: memref<32x64xf32, #tpu.memory_space<vmem>>, %arg5: memref<32x1xf32, #tpu.memory_space<vmem>>, %arg6: memref<32x32xf32, #tpu.memory_space<vmem>>, %arg7: memref<32x1xf32, #tpu.memory_space<vmem>>, %arg8: memref<16x32xf32, #tpu.memory_space<vmem>>, %arg9: memref<16x1xf32, #tpu.memory_space<vmem>>, %arg10: memref<1x16xf32, #tpu.memory_space<vmem>>, %arg11: memref<1x1xf32, #tpu.memory_space<vmem>>, %arg12: memref<1x128xf32, #tpu.memory_space<vmem>>) attributes {dimension_semantics = [#tpu.dimension_semantics<parallel>], iteration_bounds = array<i64: 1>, scalar_prefetch = 0 : i64, scratch_operands = 0 : i64, tpu.core_type = #tpu.core_type<tc>, window_params = [{transform_indices = @transform_0, window_bounds = array<i64: 6, 128>}, {pipeline_mode = #tpu.pipeline_mode<synchronous>, transform_indices = @transform_1, window_bounds = array<i64: 64, 6>}, {pipeline_mode = #tpu.pipeline_mode<synchronous>, transform_indices = @transform_2, window_bounds = array<i64: 64, 1>}, {pipeline_mode = #tpu.pipeline_mode<synchronous>, transform_indices = @transform_3, window_bounds = array<i64: 32, 64>}, {pipeline_mode = #tpu.pipeline_mode<synchronous>, transform_indices = @transform_4, window_bounds = array<i64: 32, 1>}, {pipeline_mode = #tpu.pipeline_mode<synchronous>, transform_indices = @transform_5, window_bounds = array<i64: 32, 32>}, {pipeline_mode = #tpu.pipeline_mode<synchronous>, transform_indices = @transform_6, window_bounds = array<i64: 32, 1>}, {pipeline_mode = #tpu.pipeline_mode<synchronous>, transform_indices = @transform_7, window_bounds = array<i64: 16, 32>}, {pipeline_mode = #tpu.pipeline_mode<synchronous>, transform_indices = @transform_8, window_bounds = array<i64: 16, 1>}, {pipeline_mode = #tpu.pipeline_mode<synchronous>, transform_indices = @transform_9, window_bounds = array<i64: 1, 16>}, {pipeline_mode = #tpu.pipeline_mode<synchronous>, transform_indices = @transform_10, window_bounds = array<i64: 1, 1>}, {transform_indices = @transform_11, window_bounds = array<i64: 1, 128>}]} {
    %c0 = arith.constant 0 : index
    %c0_0 = arith.constant 0 : index
    %0 = vector.load %arg1[%c0, %c0_0] : memref<6x128xf32, #tpu.memory_space<vmem>>, vector<6x128xf32>
    %c0_1 = arith.constant 0 : index
    %c0_2 = arith.constant 0 : index
    %1 = vector.load %arg2[%c0_1, %c0_2] : memref<64x6xf32, #tpu.memory_space<vmem>>, vector<64x6xf32>
    %cst = arith.constant dense<0.000000e+00> : vector<64x128xf32>
    %2 = tpu.matmul %1, %0, %cst {dimension_numbers = #tpu.dot_dimension_numbers<[1], [0], [0], [1], [0, 0, 1, 1], [], []>} : vector<64x6xf32>, vector<6x128xf32>, vector<64x128xf32> -> vector<64x128xf32>
    %c0_3 = arith.constant 0 : index
    %c0_4 = arith.constant 0 : index
    %3 = vector.load %arg3[%c0_3, %c0_4] : memref<64x1xf32, #tpu.memory_space<vmem>>, vector<64x1xf32>
    %4 = vector.broadcast %3 : vector<64x1xf32> to vector<64x128xf32>
    %5 = arith.addf %2, %4 : vector<64x128xf32>
    %cst_5 = arith.constant 0.000000e+00 : f32
    %6 = vector.broadcast %cst_5 : f32 to vector<64x128xf32>
    %7 = arith.maximumf %5, %6 : vector<64x128xf32>
    %c0_6 = arith.constant 0 : index
    %c0_7 = arith.constant 0 : index
    %8 = vector.load %arg4[%c0_6, %c0_7] : memref<32x64xf32, #tpu.memory_space<vmem>>, vector<32x64xf32>
    %cst_8 = arith.constant dense<0.000000e+00> : vector<32x128xf32>
    %9 = tpu.matmul %8, %7, %cst_8 {dimension_numbers = #tpu.dot_dimension_numbers<[1], [0], [0], [1], [0, 0, 1, 1], [], []>} : vector<32x64xf32>, vector<64x128xf32>, vector<32x128xf32> -> vector<32x128xf32>
    %c0_9 = arith.constant 0 : index
    %c0_10 = arith.constant 0 : index
    %10 = vector.load %arg5[%c0_9, %c0_10] : memref<32x1xf32, #tpu.memory_space<vmem>>, vector<32x1xf32>
    %11 = vector.broadcast %10 : vector<32x1xf32> to vector<32x128xf32>
    %12 = arith.addf %9, %11 : vector<32x128xf32>
    %cst_11 = arith.constant 0.000000e+00 : f32
    %13 = vector.broadcast %cst_11 : f32 to vector<32x128xf32>
    %14 = arith.maximumf %12, %13 : vector<32x128xf32>
    %c0_12 = arith.constant 0 : index
    %c0_13 = arith.constant 0 : index
    %15 = vector.load %arg6[%c0_12, %c0_13] : memref<32x32xf32, #tpu.memory_space<vmem>>, vector<32x32xf32>
    %cst_14 = arith.constant dense<0.000000e+00> : vector<32x128xf32>
    %16 = tpu.matmul %15, %14, %cst_14 {dimension_numbers = #tpu.dot_dimension_numbers<[1], [0], [0], [1], [0, 0, 1, 1], [], []>} : vector<32x32xf32>, vector<32x128xf32>, vector<32x128xf32> -> vector<32x128xf32>
    %c0_15 = arith.constant 0 : index
    %c0_16 = arith.constant 0 : index
    %17 = vector.load %arg7[%c0_15, %c0_16] : memref<32x1xf32, #tpu.memory_space<vmem>>, vector<32x1xf32>
    %18 = vector.broadcast %17 : vector<32x1xf32> to vector<32x128xf32>
    %19 = arith.addf %16, %18 : vector<32x128xf32>
    %20 = math.tanh %19 : vector<32x128xf32>
    %c0_17 = arith.constant 0 : index
    %c0_18 = arith.constant 0 : index
    %21 = vector.load %arg8[%c0_17, %c0_18] : memref<16x32xf32, #tpu.memory_space<vmem>>, vector<16x32xf32>
    %cst_19 = arith.constant dense<0.000000e+00> : vector<16x128xf32>
    %22 = tpu.matmul %21, %20, %cst_19 {dimension_numbers = #tpu.dot_dimension_numbers<[1], [0], [0], [1], [0, 0, 1, 1], [], []>} : vector<16x32xf32>, vector<32x128xf32>, vector<16x128xf32> -> vector<16x128xf32>
    %c0_20 = arith.constant 0 : index
    %c0_21 = arith.constant 0 : index
    %23 = vector.load %arg9[%c0_20, %c0_21] : memref<16x1xf32, #tpu.memory_space<vmem>>, vector<16x1xf32>
    %24 = vector.broadcast %23 : vector<16x1xf32> to vector<16x128xf32>
    %25 = arith.addf %22, %24 : vector<16x128xf32>
    %cst_22 = arith.constant 0.000000e+00 : f32
    %26 = vector.broadcast %cst_22 : f32 to vector<16x128xf32>
    %27 = arith.maximumf %25, %26 : vector<16x128xf32>
    %c0_23 = arith.constant 0 : index
    %c0_24 = arith.constant 0 : index
    %28 = vector.load %arg10[%c0_23, %c0_24] : memref<1x16xf32, #tpu.memory_space<vmem>>, vector<1x16xf32>
    %cst_25 = arith.constant dense<0.000000e+00> : vector<1x128xf32>
    %29 = tpu.matmul %28, %27, %cst_25 {dimension_numbers = #tpu.dot_dimension_numbers<[1], [0], [0], [1], [0, 0, 1, 1], [], []>} : vector<1x16xf32>, vector<16x128xf32>, vector<1x128xf32> -> vector<1x128xf32>
    %c0_26 = arith.constant 0 : index
    %c0_27 = arith.constant 0 : index
    %30 = vector.load %arg11[%c0_26, %c0_27] : memref<1x1xf32, #tpu.memory_space<vmem>>, vector<1x1xf32>
    %31 = vector.broadcast %30 : vector<1x1xf32> to vector<1x128xf32>
    %32 = arith.addf %29, %31 : vector<1x128xf32>
    %c0_28 = arith.constant 0 : index
    %c0_29 = arith.constant 0 : index
    %33 = vector.load %arg12[%c0_28, %c0_29] : memref<1x128xf32, #tpu.memory_space<vmem>>, vector<1x128xf32>
    tpu.vector_store %arg12[%c0_28, %c0_29], %32 {strides = array<i32>} : memref<1x128xf32, #tpu.memory_space<vmem>>, vector<1x128xf32>,
    return
  }
  func.func @transform_0(%arg0: i32) -> (i32, i32) {
    %c0_i32 = arith.constant 0 : i32
    %c0_i32_0 = arith.constant 0 : i32
    return %c0_i32, %arg0 : i32, i32
  }
  func.func @transform_1(%arg0: i32) -> (i32, i32) {
    %c0_i32 = arith.constant 0 : i32
    %c0_i32_0 = arith.constant 0 : i32
    %c0_i32_1 = arith.constant 0 : i32
    return %c0_i32, %c0_i32_0 : i32, i32
  }
  func.func @transform_2(%arg0: i32) -> (i32, i32) {
    %c0_i32 = arith.constant 0 : i32
    %c0_i32_0 = arith.constant 0 : i32
    %c0_i32_1 = arith.constant 0 : i32
    return %c0_i32, %c0_i32_0 : i32, i32
  }
  func.func @transform_3(%arg0: i32) -> (i32, i32) {
    %c0_i32 = arith.constant 0 : i32
    %c0_i32_0 = arith.constant 0 : i32
    %c0_i32_1 = arith.constant 0 : i32
    return %c0_i32, %c0_i32_0 : i32, i32
  }
  func.func @transform_4(%arg0: i32) -> (i32, i32) {
    %c0_i32 = arith.constant 0 : i32
    %c0_i32_0 = arith.constant 0 : i32
    %c0_i32_1 = arith.constant 0 : i32
    return %c0_i32, %c0_i32_0 : i32, i32
  }
  func.func @transform_5(%arg0: i32) -> (i32, i32) {
    %c0_i32 = arith.constant 0 : i32
    %c0_i32_0 = arith.constant 0 : i32
    %c0_i32_1 = arith.constant 0 : i32
    return %c0_i32, %c0_i32_0 : i32, i32
  }
  func.func @transform_6(%arg0: i32) -> (i32, i32) {
    %c0_i32 = arith.constant 0 : i32
    %c0_i32_0 = arith.constant 0 : i32
    %c0_i32_1 = arith.constant 0 : i32
    return %c0_i32, %c0_i32_0 : i32, i32
  }
  func.func @transform_7(%arg0: i32) -> (i32, i32) {
    %c0_i32 = arith.constant 0 : i32
    %c0_i32_0 = arith.constant 0 : i32
    %c0_i32_1 = arith.constant 0 : i32
    return %c0_i32, %c0_i32_0 : i32, i32
  }
  func.func @transform_8(%arg0: i32) -> (i32, i32) {
    %c0_i32 = arith.constant 0 : i32
    %c0_i32_0 = arith.constant 0 : i32
    %c0_i32_1 = arith.constant 0 : i32
    return %c0_i32, %c0_i32_0 : i32, i32
  }
  func.func @transform_9(%arg0: i32) -> (i32, i32) {
    %c0_i32 = arith.constant 0 : i32
    %c0_i32_0 = arith.constant 0 : i32
    %c0_i32_1 = arith.constant 0 : i32
    return %c0_i32, %c0_i32_0 : i32, i32
  }
  func.func @transform_10(%arg0: i32) -> (i32, i32) {
    %c0_i32 = arith.constant 0 : i32
    %c0_i32_0 = arith.constant 0 : i32
    %c0_i32_1 = arith.constant 0 : i32
    return %c0_i32, %c0_i32_0 : i32, i32
  }
  func.func @transform_11(%arg0: i32) -> (i32, i32) {
    %c0_i32 = arith.constant 0 : i32
    %c0_i32_0 = arith.constant 0 : i32
    return %c0_i32, %arg0 : i32, i32
  }
}

</mosaic_0001>

<llo_original>
// kernel: tada_forward.1
$region0: #{tada_forward.1}
  #allocation0 [shape = 'u32[]', space=smem, size = 0x4, offset = 0x4, fixed_abs, tag = 'smem constant byte address 0x4 - core index']
  #allocation1 [shape = 'u32[144,128]{1,0:T(1,128)}', space=vmem, size = 0x12000, scoped, tag = 'internal scratch']
  #allocation2 [shape = 'f32[1,1]{1,0:T(1,128)S(1)}', space=vmem, size = 0x200, scoped, tag = 'scoped memory for tada_forward.1']
  %s0 = inlined_call_operand.vmem [shape: f32[6,128], index: 0, kind: input, shape index: {}]
  %s1 = inlined_call_operand.vmem [shape: f32[64,6], index: 1, kind: input, shape index: {}]
  %s2 = inlined_call_operand.vmem [shape: f32[64,1], index: 2, kind: input, shape index: {}]
  %s3 = inlined_call_operand.vmem [shape: f32[32,64], index: 3, kind: input, shape index: {}]
  %s4 = inlined_call_operand.vmem [shape: f32[32,1], index: 4, kind: input, shape index: {}]
  %s5 = inlined_call_operand.vmem [shape: f32[32,32], index: 5, kind: input, shape index: {}]
  %s6 = inlined_call_operand.vmem [shape: f32[32,1], index: 6, kind: input, shape index: {}]
  %s7 = inlined_call_operand.vmem [shape: f32[16,32], index: 7, kind: input, shape index: {}]
  %s8 = inlined_call_operand.vmem [shape: f32[16,1], index: 8, kind: input, shape index: {}]
  %s9 = inlined_call_operand.vmem [shape: f32[1,16], index: 9, kind: input, shape index: {}]
  %s10 = inlined_call_operand.<no memory space> [shape: f32[1,1], index: 10, kind: input, shape index: {}]
  %s11 = inlined_call_operand.vmem [shape: f32[1,128], index: 11, kind: output, shape index: {}]
  %s12 = sld [smem:[#allocation0]]
  $region54: #{tada_forward.1} parent=0
    _
  %s14 = ssub.s32 1, %s12
  %s15 = scalar_select 0, %s14, %s12
  %v16 = vstv %s10
  %17 = vst [vmem:[#allocation2] sm:$0x1] %v16
  // Predicated region
  $region2: #{tada_forward.1} parent=0 // pred_check
    _
  $region3: #{tada_forward.1} parent=0 // pred_check_branch
    %19 = sbr.rel (0) target = $region5
  $region4: #{tada_forward.1} parent=0 // pred_region
    _
  $region5: #{tada_forward.1} parent=0 // pred_fallthru
    _
  // Predicated region
  $region6: #{tada_forward.1} parent=0 // pred_check
    _
  $region7: #{tada_forward.1} parent=0 // pred_check_branch
    %21 = sbr.rel (0) target = $region9
  $region8: #{tada_forward.1} parent=0 // pred_region
    _
  $region9: #{tada_forward.1} parent=0 // pred_fallthru
    _
  // Predicated region
  $region10: #{tada_forward.1} parent=0 // pred_check
    _
  $region11: #{tada_forward.1} parent=0 // pred_check_branch
    %23 = sbr.rel (0) target = $region13
  $region12: #{tada_forward.1} parent=0 // pred_region
    _
  $region13: #{tada_forward.1} parent=0 // pred_fallthru
    _
  // Predicated region
  $region14: #{tada_forward.1} parent=0 // pred_check
    _
  $region15: #{tada_forward.1} parent=0 // pred_check_branch
    %25 = sbr.rel (0) target = $region17
  $region16: #{tada_forward.1} parent=0 // pred_region
    _
  $region17: #{tada_forward.1} parent=0 // pred_fallthru
    _
  // Predicated region
  $region18: #{tada_forward.1} parent=0 // pred_check
    _
  $region19: #{tada_forward.1} parent=0 // pred_check_branch
    %27 = sbr.rel (0) target = $region21
  $region20: #{tada_forward.1} parent=0 // pred_region
    _
  $region21: #{tada_forward.1} parent=0 // pred_fallthru
    _
  // Predicated region
  $region22: #{tada_forward.1} parent=0 // pred_check
    _
  $region23: #{tada_forward.1} parent=0 // pred_check_branch
    %29 = sbr.rel (0) target = $region25
  $region24: #{tada_forward.1} parent=0 // pred_region
    _
  $region25: #{tada_forward.1} parent=0 // pred_fallthru
    _
  // Predicated region
  $region26: #{tada_forward.1} parent=0 // pred_check
    _
  $region27: #{tada_forward.1} parent=0 // pred_check_branch
    %31 = sbr.rel (0) target = $region29
  $region28: #{tada_forward.1} parent=0 // pred_region
    _
  $region29: #{tada_forward.1} parent=0 // pred_fallthru
    _
  // Predicated region
  $region30: #{tada_forward.1} parent=0 // pred_check
    _
  $region31: #{tada_forward.1} parent=0 // pred_check_branch
    %33 = sbr.rel (0) target = $region33
  $region32: #{tada_forward.1} parent=0 // pred_region
    _
  $region33: #{tada_forward.1} parent=0 // pred_fallthru
    _
  // Predicated region
  $region34: #{tada_forward.1} parent=0 // pred_check
    _
  $region35: #{tada_forward.1} parent=0 // pred_check_branch
    %35 = sbr.rel (0) target = $region37
  $region36: #{tada_forward.1} parent=0 // pred_region
    _
  $region37: #{tada_forward.1} parent=0 // pred_fallthru
    _
  // Predicated region
  $region38: #{tada_forward.1} parent=0 // pred_check
    _
  $region39: #{tada_forward.1} parent=0 // pred_check_branch
    %37 = sbr.rel (0) target = $region41
  $region40: #{tada_forward.1} parent=0 // pred_region
    _
  $region41: #{tada_forward.1} parent=0 // pred_fallthru
    _
  // Predicated region
  $region42: #{tada_forward.1} parent=0 // pred_check
    _
  $region43: #{tada_forward.1} parent=0 // pred_check_branch
    %39 = sbr.rel (0) target = $region45
  $region44: #{tada_forward.1} parent=0 // pred_region
    _
  $region45: #{tada_forward.1} parent=0 // pred_fallthru
    _
  %v40 = vld [vmem:[%s0] sm:$0x3f]
  %v41 = vld [vmem:[%s1] sm:$0xff]
  %v42 = vld [vmem:[%s1 + $0x8] sm:$0xff]
  %v43 = vld [vmem:[%s1 + $0x10] sm:$0xff]
  %v44 = vld [vmem:[%s1 + $0x18] sm:$0xff]
  %v45 = vld [vmem:[%s1 + $0x20] sm:$0xff]
  %v46 = vld [vmem:[%s1 + $0x28] sm:$0xff]
  %v47 = vld [vmem:[%s1 + $0x30] sm:$0xff]
  %v48 = vld [vmem:[%s1 + $0x38] sm:$0xff]
  %v49 = vld [vmem:[%s2] sm:$0xff]
  %v50 = vld [vmem:[%s2 + $0x8] sm:$0xff]
  %v51 = vld [vmem:[%s2 + $0x10] sm:$0xff]
  %v52 = vld [vmem:[%s2 + $0x18] sm:$0xff]
  %v53 = vld [vmem:[%s2 + $0x20] sm:$0xff]
  %v54 = vld [vmem:[%s2 + $0x28] sm:$0xff]
  %v55 = vld [vmem:[%s2 + $0x30] sm:$0xff]
  %v56 = vld [vmem:[%s2 + $0x38] sm:$0xff]
  %58 = vset.pattern.permute.xlu0 0
  %59 = vperm.xlu0 %58, %v49
  %v60 = vpop.permute.xlu0 %59
  %63 = vset.pattern.permute.xlu0 0
  %64 = vperm.xlu0 %63, %v50
  %v65 = vpop.permute.xlu0 %64
  %68 = vset.pattern.permute.xlu0 0
  %69 = vperm.xlu0 %68, %v51
  %v70 = vpop.permute.xlu0 %69
  %73 = vset.pattern.permute.xlu0 0
  %74 = vperm.xlu0 %73, %v52
  %v75 = vpop.permute.xlu0 %74
  %78 = vset.pattern.permute.xlu0 0
  %79 = vperm.xlu0 %78, %v53
  %v80 = vpop.permute.xlu0 %79
  %83 = vset.pattern.permute.xlu0 0
  %84 = vperm.xlu0 %83, %v54
  %v85 = vpop.permute.xlu0 %84
  %88 = vset.pattern.permute.xlu0 0
  %89 = vperm.xlu0 %88, %v55
  %v90 = vpop.permute.xlu0 %89
  %93 = vset.pattern.permute.xlu0 0
  %94 = vperm.xlu0 %93, %v56
  %v95 = vpop.permute.xlu0 %94
  %vm97 = vcmask 48128
  %v99 = vsel %vm97, %v41, 0
  %v102 = vsel %vm97, %v42, 0
  %v105 = vsel %vm97, %v43, 0
  %v108 = vsel %vm97, %v44, 0
  %v111 = vsel %vm97, %v45, 0
  %v114 = vsel %vm97, %v46, 0
  %v117 = vsel %vm97, %v47, 0
  %v120 = vsel %vm97, %v48, 0
  %vm122 = vcmask 1045504
  %v124 = vsel %vm122, %v40, 0
  %126 = vmatprep.subr.mxu0 0.0
  %127 = vmatpush1.msra.mxu0 %v124
  %128 = vmatprep.subr.mxu0 0.0
  %129 = vmatpush1.msra.mxu0 0.0
  %130 = vmatprep.subr.mxu0 0.0
  %131 = vmatpush1.msra.mxu0 0.0
  %132 = vmatprep.subr.mxu0 0.0
  %133 = vmatpush1.msra.mxu0 0.0
  %134 = vmatprep.subr.mxu0 0.0
  %135 = vmatpush1.msra.mxu0 0.0
  %136 = vmatprep.subr.mxu0 0.0
  %137 = vmatpush1.msra.mxu0 0.0
  %138 = vmatprep.subr.mxu0 0.0
  %139 = vmatpush1.msra.mxu0 0.0
  %140 = vmatprep.subr.mxu0 0.0
  %141 = vmatpush1.msra.mxu0 0.0
  %142 = vmatprep.subr.mxu0 0.0
  %143 = vmatpush1.msra.mxu0 0.0
  %144 = vmatprep.subr.mxu0 0.0
  %145 = vmatpush1.msra.mxu0 0.0
  %146 = vmatprep.subr.mxu0 0.0
  %147 = vmatpush1.msra.mxu0 0.0
  %148 = vmatprep.subr.mxu0 0.0
  %149 = vmatpush1.msra.mxu0 0.0
  %150 = vmatprep.subr.mxu0 0.0
  %151 = vmatpush1.msra.mxu0 0.0
  %152 = vmatprep.subr.mxu0 0.0
  %153 = vmatpush1.msra.mxu0 0.0
  %154 = vmatprep.subr.mxu0 0.0
  %155 = vmatpush1.msra.mxu0 0.0
  %156 = vmatprep.subr.mxu0 0.0
  %157 = vmatpush1.msra.mxu0 0.0
  %158 = vmatprep.subr.mxu0 0.0
  %159 = vmatpush1.msra.mxu0 0.0
  %160 = vmatprep.subr.mxu0 0.0
  %161 = vmatpush1.msra.mxu0 0.0
  %162 = vmatprep.subr.mxu0 0.0
  %163 = vmatpush1.msra.mxu0 0.0
  %164 = vmatprep.subr.mxu0 0.0
  %165 = vmatpush1.msra.mxu0 0.0
  %166 = vmatprep.subr.mxu0 0.0
  %167 = vmatpush1.msra.mxu0 0.0
  %168 = vmatprep.subr.mxu0 0.0
  %169 = vmatpush1.msra.mxu0 0.0
  %170 = vmatprep.subr.mxu0 0.0
  %171 = vmatpush1.msra.mxu0 0.0
  %172 = vmatprep.subr.mxu0 0.0
  %173 = vmatpush1.msra.mxu0 0.0
  %174 = vmatprep.subr.mxu0 0.0
  %175 = vmatpush1.msra.mxu0 0.0
  %176 = vmatprep.subr.mxu0 0.0
  %177 = vmatpush1.msra.mxu0 0.0
  %178 = vmatprep.subr.mxu0 0.0
  %179 = vmatpush1.msra.mxu0 0.0
  %180 = vmatprep.subr.mxu0 0.0
  %181 = vmatpush1.msra.mxu0 0.0
  %182 = vmatprep.subr.mxu0 0.0
  %183 = vmatpush1.msra.mxu0 0.0
  %184 = vmatprep.subr.mxu0 0.0
  %185 = vmatpush1.msra.mxu0 0.0
  %186 = vmatprep.subr.mxu0 0.0
  %187 = vmatpush1.msra.mxu0 0.0
  %188 = vmatprep.subr.mxu0 0.0
  %189 = vmatpush1.msra.mxu0 0.0
  %190 = vmatprep.mubr.f32.mxu0 0.0
  %191 = vmatmul.mubr.f32.gmra.mrb[0].mxu0 %v99
  %v192 = vpop.f32.mrb[0].mxu0
  %v193 = vadd.f32 %v60, %v192
  %v194 = vpop.f32.mrb[0].mxu0
  %195 = vmatprep.mubr.f32.mxu0 0.0
  %196 = vmatmul.mubr.f32.gmra.mrb[0].mxu0 %v102
  %v197 = vpop.f32.mrb[0].mxu0
  %v198 = vadd.f32 %v65, %v197
  %v199 = vpop.f32.mrb[0].mxu0
  %200 = vmatprep.mubr.f32.mxu0 0.0
  %201 = vmatmul.mubr.f32.gmra.mrb[0].mxu0 %v105
  %v202 = vpop.f32.mrb[0].mxu0
  %v203 = vadd.f32 %v70, %v202
  %v204 = vpop.f32.mrb[0].mxu0
  %205 = vmatprep.mubr.f32.mxu0 0.0
  %206 = vmatmul.mubr.f32.gmra.mrb[0].mxu0 %v108
  %v207 = vpop.f32.mrb[0].mxu0
  %v208 = vadd.f32 %v75, %v207
  %v209 = vpop.f32.mrb[0].mxu0
  %210 = vmatprep.mubr.f32.mxu0 0.0
  %211 = vmatmul.mubr.f32.gmra.mrb[0].mxu0 %v111
  %v212 = vpop.f32.mrb[0].mxu0
  %v213 = vadd.f32 %v80, %v212
  %v214 = vpop.f32.mrb[0].mxu0
  %215 = vmatprep.mubr.f32.mxu0 0.0
  %216 = vmatmul.mubr.f32.gmra.mrb[0].mxu0 %v114
  %v217 = vpop.f32.mrb[0].mxu0
  %v218 = vadd.f32 %v85, %v217
  %v219 = vpop.f32.mrb[0].mxu0
  %220 = vmatprep.mubr.f32.mxu0 0.0
  %221 = vmatmul.mubr.f32.gmra.mrb[0].mxu0 %v117
  %v222 = vpop.f32.mrb[0].mxu0
  %v223 = vadd.f32 %v90, %v222
  %v224 = vpop.f32.mrb[0].mxu0
  %225 = vmatprep.mubr.f32.mxu0 0.0
  %226 = vmatmul.mubr.f32.gmra.mrb[0].mxu0 %v120
  %v227 = vpop.f32.mrb[0].mxu0
  %v228 = vadd.f32 %v95, %v227
  %v229 = vpop.f32.mrb[0].mxu0
  %230 = vdwg.mxu0
  %v231 = vmax.f32 %v193, 0.0
  %v232 = vmax.f32 %v198, 0.0
  %v233 = vmax.f32 %v203, 0.0
  %v234 = vmax.f32 %v208, 0.0
  %v235 = vmax.f32 %v213, 0.0
  %v236 = vmax.f32 %v218, 0.0
  %v237 = vmax.f32 %v223, 0.0
  %v238 = vmax.f32 %v228, 0.0
  %v239 = vld [vmem:[%s3] sm:$0xff]
  %v240 = vld [vmem:[%s3 + $0x8] sm:$0xff]
  %v241 = vld [vmem:[%s3 + $0x10] sm:$0xff]
  %v242 = vld [vmem:[%s3 + $0x18] sm:$0xff]
  %v243 = vld [vmem:[%s4] sm:$0xff]
  %v244 = vld [vmem:[%s4 + $0x8] sm:$0xff]
  %v245 = vld [vmem:[%s4 + $0x10] sm:$0xff]
  %v246 = vld [vmem:[%s4 + $0x18] sm:$0xff]
  %248 = vset.pattern.permute.xlu0 0
  %249 = vperm.xlu0 %248, %v243
  %v250 = vpop.permute.xlu0 %249
  %253 = vset.pattern.permute.xlu0 0
  %254 = vperm.xlu0 %253, %v244
  %v255 = vpop.permute.xlu0 %254
  %258 = vset.pattern.permute.xlu0 0
  %259 = vperm.xlu0 %258, %v245
  %v260 = vpop.permute.xlu0 %259
  %263 = vset.pattern.permute.xlu0 0
  %264 = vperm.xlu0 %263, %v246
  %v265 = vpop.permute.xlu0 %264
  %vm267 = vcmask 523264
  %v269 = vsel %vm267, %v239, 0
  %v272 = vsel %vm267, %v240, 0
  %v275 = vsel %vm267, %v241, 0
  %v278 = vsel %vm267, %v242, 0
  %280 = vmatprep.subr.mxu0 0.0
  %281 = vmatpush1.msra.mxu0 %v231
  %282 = vmatprep.subr.mxu0 0.0
  %283 = vmatpush1.msra.mxu0 %v232
  %284 = vmatprep.subr.mxu0 0.0
  %285 = vmatpush1.msra.mxu0 %v233
  %286 = vmatprep.subr.mxu0 0.0
  %287 = vmatpush1.msra.mxu0 %v234
  %288 = vmatprep.subr.mxu0 0.0
  %289 = vmatpush1.msra.mxu0 %v235
  %290 = vmatprep.subr.mxu0 0.0
  %291 = vmatpush1.msra.mxu0 %v236
  %292 = vmatprep.subr.mxu0 0.0
  %293 = vmatpush1.msra.mxu0 %v237
  %294 = vmatprep.subr.mxu0 0.0
  %295 = vmatpush1.msra.mxu0 %v238
  %296 = vmatprep.subr.mxu0 0.0
  %297 = vmatpush1.msra.mxu0 0.0
  %298 = vmatprep.subr.mxu0 0.0
  %299 = vmatpush1.msra.mxu0 0.0
  %300 = vmatprep.subr.mxu0 0.0
  %301 = vmatpush1.msra.mxu0 0.0
  %302 = vmatprep.subr.mxu0 0.0
  %303 = vmatpush1.msra.mxu0 0.0
  %304 = vmatprep.subr.mxu0 0.0
  %305 = vmatpush1.msra.mxu0 0.0
  %306 = vmatprep.subr.mxu0 0.0
  %307 = vmatpush1.msra.mxu0 0.0
  %308 = vmatprep.subr.mxu0 0.0
  %309 = vmatpush1.msra.mxu0 0.0
  %310 = vmatprep.subr.mxu0 0.0
  %311 = vmatpush1.msra.mxu0 0.0
  %312 = vmatprep.subr.mxu0 0.0
  %313 = vmatpush1.msra.mxu0 0.0
  %314 = vmatprep.subr.mxu0 0.0
  %315 = vmatpush1.msra.mxu0 0.0
  %316 = vmatprep.subr.mxu0 0.0
  %317 = vmatpush1.msra.mxu0 0.0
  %318 = vmatprep.subr.mxu0 0.0
  %319 = vmatpush1.msra.mxu0 0.0
  %320 = vmatprep.subr.mxu0 0.0
  %321 = vmatpush1.msra.mxu0 0.0
  %322 = vmatprep.subr.mxu0 0.0
  %323 = vmatpush1.msra.mxu0 0.0
  %324 = vmatprep.subr.mxu0 0.0
  %325 = vmatpush1.msra.mxu0 0.0
  %326 = vmatprep.subr.mxu0 0.0
  %327 = vmatpush1.msra.mxu0 0.0
  %328 = vmatprep.subr.mxu0 0.0
  %329 = vmatpush1.msra.mxu0 0.0
  %330 = vmatprep.subr.mxu0 0.0
  %331 = vmatpush1.msra.mxu0 0.0
  %332 = vmatprep.subr.mxu0 0.0
  %333 = vmatpush1.msra.mxu0 0.0
  %334 = vmatprep.subr.mxu0 0.0
  %335 = vmatpush1.msra.mxu0 0.0
  %336 = vmatprep.subr.mxu0 0.0
  %337 = vmatpush1.msra.mxu0 0.0
  %338 = vmatprep.subr.mxu0 0.0
  %339 = vmatpush1.msra.mxu0 0.0
  %340 = vmatprep.subr.mxu0 0.0
  %341 = vmatpush1.msra.mxu0 0.0
  %342 = vmatprep.subr.mxu0 0.0
  %343 = vmatpush1.msra.mxu0 0.0
  %344 = vmatprep.mubr.f32.mxu0 0.0
  %345 = vmatmul.mubr.f32.gmra.mrb[0].mxu0 %v269
  %v346 = vpop.f32.mrb[0].mxu0
  %v347 = vadd.f32 %v250, %v346
  %v348 = vpop.f32.mrb[0].mxu0
  %349 = vmatprep.mubr.f32.mxu0 0.0
  %350 = vmatmul.mubr.f32.gmra.mrb[0].mxu0 %v272
  %v351 = vpop.f32.mrb[0].mxu0
  %v352 = vadd.f32 %v255, %v351
  %v353 = vpop.f32.mrb[0].mxu0
  %354 = vmatprep.mubr.f32.mxu0 0.0
  %355 = vmatmul.mubr.f32.gmra.mrb[0].mxu0 %v275
  %v356 = vpop.f32.mrb[0].mxu0
  %v357 = vadd.f32 %v260, %v356
  %v358 = vpop.f32.mrb[0].mxu0
  %359 = vmatprep.mubr.f32.mxu0 0.0
  %360 = vmatmul.mubr.f32.gmra.mrb[0].mxu0 %v278
  %v361 = vpop.f32.mrb[0].mxu0
  %v362 = vadd.f32 %v265, %v361
  %v363 = vpop.f32.mrb[0].mxu0
  %364 = vdwg.mxu0
  %v365 = vmax.f32 %v347, 0.0
  %v366 = vmax.f32 %v352, 0.0
  %v367 = vmax.f32 %v357, 0.0
  %v368 = vmax.f32 %v362, 0.0
  %v369 = vld [vmem:[%s5] sm:$0xff]
  %v370 = vld [vmem:[%s5 + $0x8] sm:$0xff]
  %v371 = vld [vmem:[%s5 + $0x10] sm:$0xff]
  %v372 = vld [vmem:[%s5 + $0x18] sm:$0xff]
  %v373 = vld [vmem:[%s6] sm:$0xff]
  %v374 = vld [vmem:[%s6 + $0x8] sm:$0xff]
  %v375 = vld [vmem:[%s6 + $0x10] sm:$0xff]
  %v376 = vld [vmem:[%s6 + $0x18] sm:$0xff]
  %378 = vset.pattern.permute.xlu0 0
  %379 = vperm.xlu0 %378, %v373
  %v380 = vpop.permute.xlu0 %379
  %383 = vset.pattern.permute.xlu0 0
  %384 = vperm.xlu0 %383, %v374
  %v385 = vpop.permute.xlu0 %384
  %388 = vset.pattern.permute.xlu0 0
  %389 = vperm.xlu0 %388, %v375
  %v390 = vpop.permute.xlu0 %389
  %393 = vset.pattern.permute.xlu0 0
  %394 = vperm.xlu0 %393, %v376
  %v395 = vpop.permute.xlu0 %394
  %vm397 = vcmask 261120
  %v399 = vsel %vm397, %v369, 0
  %v402 = vsel %vm397, %v370, 0
  %v405 = vsel %vm397, %v371, 0
  %v408 = vsel %vm397, %v372, 0
  %410 = vmatprep.subr.mxu0 0.0
  %411 = vmatpush1.msra.mxu0 %v365
  %412 = vmatprep.subr.mxu0 0.0
  %413 = vmatpush1.msra.mxu0 %v366
  %414 = vmatprep.subr.mxu0 0.0
  %415 = vmatpush1.msra.mxu0 %v367
  %416 = vmatprep.subr.mxu0 0.0
  %417 = vmatpush1.msra.mxu0 %v368
  %418 = vmatprep.subr.mxu0 0.0
  %419 = vmatpush1.msra.mxu0 0.0
  %420 = vmatprep.subr.mxu0 0.0
  %421 = vmatpush1.msra.mxu0 0.0
  %422 = vmatprep.subr.mxu0 0.0
  %423 = vmatpush1.msra.mxu0 0.0
  %424 = vmatprep.subr.mxu0 0.0
  %425 = vmatpush1.msra.mxu0 0.0
  %426 = vmatprep.subr.mxu0 0.0
  %427 = vmatpush1.msra.mxu0 0.0
  %428 = vmatprep.subr.mxu0 0.0
  %429 = vmatpush1.msra.mxu0 0.0
  %430 = vmatprep.subr.mxu0 0.0
  %431 = vmatpush1.msra.mxu0 0.0
  %432 = vmatprep.subr.mxu0 0.0
  %433 = vmatpush1.msra.mxu0 0.0
  %434 = vmatprep.subr.mxu0 0.0
  %435 = vmatpush1.msra.mxu0 0.0
  %436 = vmatprep.subr.mxu0 0.0
  %437 = vmatpush1.msra.mxu0 0.0
  %438 = vmatprep.subr.mxu0 0.0
  %439 = vmatpush1.msra.mxu0 0.0
  %440 = vmatprep.subr.mxu0 0.0
  %441 = vmatpush1.msra.mxu0 0.0
  %442 = vmatprep.subr.mxu0 0.0
  %443 = vmatpush1.msra.mxu0 0.0
  %444 = vmatprep.subr.mxu0 0.0
  %445 = vmatpush1.msra.mxu0 0.0
  %446 = vmatprep.subr.mxu0 0.0
  %447 = vmatpush1.msra.mxu0 0.0
  %448 = vmatprep.subr.mxu0 0.0
  %449 = vmatpush1.msra.mxu0 0.0
  %450 = vmatprep.subr.mxu0 0.0
  %451 = vmatpush1.msra.mxu0 0.0
  %452 = vmatprep.subr.mxu0 0.0
  %453 = vmatpush1.msra.mxu0 0.0
  %454 = vmatprep.subr.mxu0 0.0
  %455 = vmatpush1.msra.mxu0 0.0
  %456 = vmatprep.subr.mxu0 0.0
  %457 = vmatpush1.msra.mxu0 0.0
  %458 = vmatprep.subr.mxu0 0.0
  %459 = vmatpush1.msra.mxu0 0.0
  %460 = vmatprep.subr.mxu0 0.0
  %461 = vmatpush1.msra.mxu0 0.0
  %462 = vmatprep.subr.mxu0 0.0
  %463 = vmatpush1.msra.mxu0 0.0
  %464 = vmatprep.subr.mxu0 0.0
  %465 = vmatpush1.msra.mxu0 0.0
  %466 = vmatprep.subr.mxu0 0.0
  %467 = vmatpush1.msra.mxu0 0.0
  %468 = vmatprep.subr.mxu0 0.0
  %469 = vmatpush1.msra.mxu0 0.0
  %470 = vmatprep.subr.mxu0 0.0
  %471 = vmatpush1.msra.mxu0 0.0
  %472 = vmatprep.subr.mxu0 0.0
  %473 = vmatpush1.msra.mxu0 0.0
  %474 = vmatprep.mubr.f32.mxu0 0.0
  %475 = vmatmul.mubr.f32.gmra.mrb[0].mxu0 %v399
  %v476 = vpop.f32.mrb[0].mxu0
  %v477 = vadd.f32 %v380, %v476
  %v478 = vpop.f32.mrb[0].mxu0
  %479 = vmatprep.mubr.f32.mxu0 0.0
  %480 = vmatmul.mubr.f32.gmra.mrb[0].mxu0 %v402
  %v481 = vpop.f32.mrb[0].mxu0
  %v482 = vadd.f32 %v385, %v481
  %v483 = vpop.f32.mrb[0].mxu0
  %484 = vmatprep.mubr.f32.mxu0 0.0
  %485 = vmatmul.mubr.f32.gmra.mrb[0].mxu0 %v405
  %v486 = vpop.f32.mrb[0].mxu0
  %v487 = vadd.f32 %v390, %v486
  %v488 = vpop.f32.mrb[0].mxu0
  %489 = vmatprep.mubr.f32.mxu0 0.0
  %490 = vmatmul.mubr.f32.gmra.mrb[0].mxu0 %v408
  %v491 = vpop.f32.mrb[0].mxu0
  %v492 = vadd.f32 %v395, %v491
  %v493 = vpop.f32.mrb[0].mxu0
  %494 = vdwg.mxu0
  %v495 = vtanh.pop %v477
  %v496 = vtanh.pop %v482
  %v497 = vtanh.pop %v487
  %v498 = vtanh.pop %v492
  %v499 = vld [vmem:[%s7] sm:$0xff]
  %v500 = vld [vmem:[%s7 + $0x8] sm:$0xff]
  %v501 = vld [vmem:[%s8] sm:$0xff]
  %v502 = vld [vmem:[%s8 + $0x8] sm:$0xff]
  %504 = vset.pattern.permute.xlu0 0
  %505 = vperm.xlu0 %504, %v501
  %v506 = vpop.permute.xlu0 %505
  %509 = vset.pattern.permute.xlu0 0
  %510 = vperm.xlu0 %509, %v502
  %v511 = vpop.permute.xlu0 %510
  %v514 = vsel %vm397, %v499, 0
  %v517 = vsel %vm397, %v500, 0
  %519 = vmatprep.subr.mxu0 0.0
  %520 = vmatpush1.msra.mxu0 %v495
  %521 = vmatprep.subr.mxu0 0.0
  %522 = vmatpush1.msra.mxu0 %v496
  %523 = vmatprep.subr.mxu0 0.0
  %524 = vmatpush1.msra.mxu0 %v497
  %525 = vmatprep.subr.mxu0 0.0
  %526 = vmatpush1.msra.mxu0 %v498
  %527 = vmatprep.subr.mxu0 0.0
  %528 = vmatpush1.msra.mxu0 0.0
  %529 = vmatprep.subr.mxu0 0.0
  %530 = vmatpush1.msra.mxu0 0.0
  %531 = vmatprep.subr.mxu0 0.0
  %532 = vmatpush1.msra.mxu0 0.0
  %533 = vmatprep.subr.mxu0 0.0
  %534 = vmatpush1.msra.mxu0 0.0
  %535 = vmatprep.subr.mxu0 0.0
  %536 = vmatpush1.msra.mxu0 0.0
  %537 = vmatprep.subr.mxu0 0.0
  %538 = vmatpush1.msra.mxu0 0.0
  %539 = vmatprep.subr.mxu0 0.0
  %540 = vmatpush1.msra.mxu0 0.0
  %541 = vmatprep.subr.mxu0 0.0
  %542 = vmatpush1.msra.mxu0 0.0
  %543 = vmatprep.subr.mxu0 0.0
  %544 = vmatpush1.msra.mxu0 0.0
  %545 = vmatprep.subr.mxu0 0.0
  %546 = vmatpush1.msra.mxu0 0.0
  %547 = vmatprep.subr.mxu0 0.0
  %548 = vmatpush1.msra.mxu0 0.0
  %549 = vmatprep.subr.mxu0 0.0
  %550 = vmatpush1.msra.mxu0 0.0
  %551 = vmatprep.subr.mxu0 0.0
  %552 = vmatpush1.msra.mxu0 0.0
  %553 = vmatprep.subr.mxu0 0.0
  %554 = vmatpush1.msra.mxu0 0.0
  %555 = vmatprep.subr.mxu0 0.0
  %556 = vmatpush1.msra.mxu0 0.0
  %557 = vmatprep.subr.mxu0 0.0
  %558 = vmatpush1.msra.mxu0 0.0
  %559 = vmatprep.subr.mxu0 0.0
  %560 = vmatpush1.msra.mxu0 0.0
  %561 = vmatprep.subr.mxu0 0.0
  %562 = vmatpush1.msra.mxu0 0.0
  %563 = vmatprep.subr.mxu0 0.0
  %564 = vmatpush1.msra.mxu0 0.0
  %565 = vmatprep.subr.mxu0 0.0
  %566 = vmatpush1.msra.mxu0 0.0
  %567 = vmatprep.subr.mxu0 0.0
  %568 = vmatpush1.msra.mxu0 0.0
  %569 = vmatprep.subr.mxu0 0.0
  %570 = vmatpush1.msra.mxu0 0.0
  %571 = vmatprep.subr.mxu0 0.0
  %572 = vmatpush1.msra.mxu0 0.0
  %573 = vmatprep.subr.mxu0 0.0
  %574 = vmatpush1.msra.mxu0 0.0
  %575 = vmatprep.subr.mxu0 0.0
  %576 = vmatpush1.msra.mxu0 0.0
  %577 = vmatprep.subr.mxu0 0.0
  %578 = vmatpush1.msra.mxu0 0.0
  %579 = vmatprep.subr.mxu0 0.0
  %580 = vmatpush1.msra.mxu0 0.0
  %581 = vmatprep.subr.mxu0 0.0
  %582 = vmatpush1.msra.mxu0 0.0
  %583 = vmatprep.mubr.f32.mxu0 0.0
  %584 = vmatmul.mubr.f32.gmra.mrb[0].mxu0 %v514
  %v585 = vpop.f32.mrb[0].mxu0
  %v586 = vadd.f32 %v506, %v585
  %v587 = vpop.f32.mrb[0].mxu0
  %588 = vmatprep.mubr.f32.mxu0 0.0
  %589 = vmatmul.mubr.f32.gmra.mrb[0].mxu0 %v517
  %v590 = vpop.f32.mrb[0].mxu0
  %v591 = vadd.f32 %v511, %v590
  %v592 = vpop.f32.mrb[0].mxu0
  %593 = vdwg.mxu0
  %v594 = vmax.f32 %v586, 0.0
  %v595 = vmax.f32 %v591, 0.0
  %v596 = vld [vmem:[%s9] sm:$0x1]
  %v597 = vld [vmem:[#allocation2] sm:$0x1]
  %599 = vset.pattern.permute.xlu0 0
  %600 = vperm.xlu0 %599, %v597
  %v601 = vpop.permute.xlu0 %600
  %v603 = vlaneseq
  %v604 = vshrl.u32 %v603, 7
  %v605 = vsub.s32 0, %v604
  %v606 = vrot.slane %v601, %v605
  %vm607 = vcmask 130048
  %v609 = vsel %vm607, %v596, 0
  %611 = vmatprep.subr.mxu0 0.0
  %612 = vmatpush1.msra.mxu0 %v594
  %613 = vmatprep.subr.mxu0 0.0
  %614 = vmatpush1.msra.mxu0 %v595
  %615 = vmatprep.subr.mxu0 0.0
  %616 = vmatpush1.msra.mxu0 0.0
  %617 = vmatprep.subr.mxu0 0.0
  %618 = vmatpush1.msra.mxu0 0.0
  %619 = vmatprep.subr.mxu0 0.0
  %620 = vmatpush1.msra.mxu0 0.0
  %621 = vmatprep.subr.mxu0 0.0
  %622 = vmatpush1.msra.mxu0 0.0
  %623 = vmatprep.subr.mxu0 0.0
  %624 = vmatpush1.msra.mxu0 0.0
  %625 = vmatprep.subr.mxu0 0.0
  %626 = vmatpush1.msra.mxu0 0.0
  %627 = vmatprep.subr.mxu0 0.0
  %628 = vmatpush1.msra.mxu0 0.0
  %629 = vmatprep.subr.mxu0 0.0
  %630 = vmatpush1.msra.mxu0 0.0
  %631 = vmatprep.subr.mxu0 0.0
  %632 = vmatpush1.msra.mxu0 0.0
  %633 = vmatprep.subr.mxu0 0.0
  %634 = vmatpush1.msra.mxu0 0.0
  %635 = vmatprep.subr.mxu0 0.0
  %636 = vmatpush1.msra.mxu0 0.0
  %637 = vmatprep.subr.mxu0 0.0
  %638 = vmatpush1.msra.mxu0 0.0
  %639 = vmatprep.subr.mxu0 0.0
  %640 = vmatpush1.msra.mxu0 0.0
  %641 = vmatprep.subr.mxu0 0.0
  %642 = vmatpush1.msra.mxu0 0.0
  %643 = vmatprep.subr.mxu0 0.0
  %644 = vmatpush1.msra.mxu0 0.0
  %645 = vmatprep.subr.mxu0 0.0
  %646 = vmatpush1.msra.mxu0 0.0
  %647 = vmatprep.subr.mxu0 0.0
  %648 = vmatpush1.msra.mxu0 0.0
  %649 = vmatprep.subr.mxu0 0.0
  %650 = vmatpush1.msra.mxu0 0.0
  %651 = vmatprep.subr.mxu0 0.0
  %652 = vmatpush1.msra.mxu0 0.0
  %653 = vmatprep.subr.mxu0 0.0
  %654 = vmatpush1.msra.mxu0 0.0
  %655 = vmatprep.subr.mxu0 0.0
  %656 = vmatpush1.msra.mxu0 0.0
  %657 = vmatprep.subr.mxu0 0.0
  %658 = vmatpush1.msra.mxu0 0.0
  %659 = vmatprep.subr.mxu0 0.0
  %660 = vmatpush1.msra.mxu0 0.0
  %661 = vmatprep.subr.mxu0 0.0
  %662 = vmatpush1.msra.mxu0 0.0
  %663 = vmatprep.subr.mxu0 0.0
  %664 = vmatpush1.msra.mxu0 0.0
  %665 = vmatprep.subr.mxu0 0.0
  %666 = vmatpush1.msra.mxu0 0.0
  %667 = vmatprep.subr.mxu0 0.0
  %668 = vmatpush1.msra.mxu0 0.0
  %669 = vmatprep.subr.mxu0 0.0
  %670 = vmatpush1.msra.mxu0 0.0
  %671 = vmatprep.subr.mxu0 0.0
  %672 = vmatpush1.msra.mxu0 0.0
  %673 = vmatprep.subr.mxu0 0.0
  %674 = vmatpush1.msra.mxu0 0.0
  %675 = vmatprep.mubr.f32.mxu0 0.0
  %676 = vmatmul.mubr.f32.gmra.mrb[0].mxu0 %v609
  %v677 = vpop.f32.mrb[0].mxu0
  %v678 = vadd.f32 %v606, %v677
  %v679 = vpop.f32.mrb[0].mxu0
  %680 = vdwg.mxu0
  %681 = vst [vmem:[%s11] sm:$0x1] %v678
  // Predicated region
  $region46: #{tada_forward.1} parent=0 // pred_check
    _
  $region47: #{tada_forward.1} parent=0 // pred_check_branch
    %683 = sbr.rel (0) target = $region49
  $region48: #{tada_forward.1} parent=0 // pred_region
    _
  $region49: #{tada_forward.1} parent=0 // pred_fallthru
    _
  // Predicated region
  $region50: #{tada_forward.1} parent=0 // pred_check
    _
  $region51: #{tada_forward.1} parent=0 // pred_check_branch
    %685 = sbr.rel (0) target = $region53
  $region52: #{tada_forward.1} parent=0 // pred_region
    _
  $region53: #{tada_forward.1} parent=0 // pred_fallthru
    _

</llo_original>
